<compile_context>
chip_gen: v5e
topology: v5e:2x2
jax: 0.10.0
libtpu: 0.0.40
codegen_flags: <defaults>
</compile_context>

<pallas_src>
import functools

import jax
import jax.numpy as jnp
from jax.experimental import pallas as pl
from jax.experimental.pallas import tpu as pltpu


# ----------------------------------------------------------------------------
# Fused kernel: 3 propagation layers for both sides + concatenated output.
#   dis_ref:  (dis_num,  F)          disease embedding table (f32)
#   drug_ref: (drug_num, F)          drug embedding table (f32)
#   dd_ref:   (dis_num,  drug_num)   dense dis<-drug adjacency (bf16 or f32)
#   du_ref:   (drug_num, dis_num)    dense drug<-dis adjacency (bf16 or f32)
#   di_ref:   (dis_num,  1)          per-disease degree scale (f32)
#   dj_ref:   (drug_num, 1)          per-drug degree scale (f32)
#   out_dis_ref:  (dis_num,  4F)
#   out_drug_ref: (drug_num, 4F)
# ----------------------------------------------------------------------------
def _bpr_fused_kernel(dis_ref, drug_ref, dd_ref, du_ref, di_ref, dj_ref,
                      out_dis_ref, out_drug_ref, *, mxu_dtype):
    dis0 = dis_ref[...]
    drug0 = drug_ref[...]
    adj_dis = dd_ref[...]      # already in its HBM dtype (bf16 fast path)
    adj_drug = du_ref[...]

    # Hoisted (M,1)->(M,F) broadcasts: done once, reused by all three layers.
    d_i = jnp.broadcast_to(di_ref[...], dis0.shape)
    d_j = jnp.broadcast_to(dj_ref[...], drug0.shape)

    def mm(adj, emb):
        # Only the tiny (M, F) embedding operand is cast in-kernel; the big
        # adjacency was cast at the HBM boundary.  Always accumulate in f32.
        return jnp.dot(adj, emb.astype(mxu_dtype),
                       preferred_element_type=jnp.float32)

    # Layer-0 columns of the concat need the final ReLU; layers 1..3 are
    # already non-negative so the trailing ReLU is a no-op for them.
    dis_parts = [jnp.maximum(dis0, 0.0)]
    drug_parts = [jnp.maximum(drug0, 0.0)]

    g_dis, g_drug = dis0, drug0
    for _ in range(3):
        new_dis = jnp.maximum(mm(adj_dis, g_drug) + g_dis * d_i, 0.0)
        new_drug = jnp.maximum(mm(adj_drug, g_dis) + g_drug * d_j, 0.0)
        dis_parts.append(new_dis)
        drug_parts.append(new_drug)
        g_dis, g_drug = new_dis, new_drug

    # Single lane-dense (M, 4F) store per side instead of four masked
    # sub-128-lane column-slice stores.
    out_dis_ref[...] = jnp.concatenate(dis_parts, axis=-1)
    out_drug_ref[...] = jnp.concatenate(drug_parts, axis=-1)


def _padded_bytes(shape, dtype):
    """Conservative (8,128)-tile-padded VMEM footprint of one array."""
    itemsize = jnp.dtype(dtype).itemsize
    if len(shape) == 0:
        return 8 * 128 * itemsize
    if len(shape) == 1:
        rows, cols, lead = 1, shape[0], 1
    else:
        rows, cols = shape[-2], shape[-1]
        lead = 1
        for s in shape[:-2]:
            lead *= s
    rows_p = -(-rows // 8) * 8
    cols_p = -(-cols // 128) * 128
    return lead * rows_p * cols_p * itemsize


# ----------------------------------------------------------------------------
# Full BPR.forward (single pallas_call).
# ----------------------------------------------------------------------------
def bpr_forward(dis_emb, drug_emb, dis_drug_matrix, drug_dis_matrix, d_i, d_j,
                *, use_bf16_matmul=True):
    dis_emb = jnp.asarray(dis_emb, jnp.float32)
    drug_emb = jnp.asarray(drug_emb, jnp.float32)

    # Cast the dominant adjacency operands at the HBM boundary (bf16 fast
    # path): halves DMA bytes and VMEM residency, MXU accumulates in f32.
    mxu_dtype = jnp.bfloat16 if use_bf16_matmul else jnp.float32
    dis_drug_matrix = jnp.asarray(dis_drug_matrix).astype(mxu_dtype)
    drug_dis_matrix = jnp.asarray(drug_dis_matrix).astype(mxu_dtype)

    dis_num, F = dis_emb.shape
    drug_num = drug_emb.shape[0]

    # Degree scales as (M, 1); broadcast happens (once) inside the kernel.
    d_i = jnp.asarray(d_i, jnp.float32).reshape(dis_num, -1)[:, :1]
    d_j = jnp.asarray(d_j, jnp.float32).reshape(drug_num, -1)[:, :1]

    out_shapes = (
        jax.ShapeDtypeStruct((dis_num, 4 * F), jnp.float32),
        jax.ShapeDtypeStruct((drug_num, 4 * F), jnp.float32),
    )

    # Chip-derived VMEM budget: ~2x the padded single-block working set,
    # clamped below physical capacity (64 MiB on v7x, 128 MiB on v5e/v6e).
    working_set = (
        _padded_bytes(dis_emb.shape, dis_emb.dtype)
        + _padded_bytes(drug_emb.shape, drug_emb.dtype)
        + _padded_bytes(dis_drug_matrix.shape, dis_drug_matrix.dtype)
        + _padded_bytes(drug_dis_matrix.shape, drug_dis_matrix.dtype)
        + _padded_bytes(d_i.shape, d_i.dtype)
        + _padded_bytes(d_j.shape, d_j.dtype)
        + sum(_padded_bytes(o.shape, o.dtype) for o in out_shapes))
    try:
        vmem_cap = pltpu.get_tpu_info().vmem_capacity_bytes
    except Exception:
        vmem_cap = 64 * 1024 * 1024  # safe lower bound across generations
    headroom = 8 * 1024 * 1024
    if 2 * working_set > vmem_cap - headroom:
        # TODO(synk): K/M-tiled streaming grid for graphs that exceed VMEM.
        raise ValueError(
            "Single-block BPR kernel working set exceeds this chip's VMEM; "
            "tiled-grid path not implemented for this size.")
    vmem_limit = int(min(max(2 * working_set, 16 * 1024 * 1024),
                         vmem_cap - headroom))

    # Advisory cost so XLA schedules the custom call realistically.
    flops = 2 * 3 * 2 * dis_num * drug_num * F        # 3 layers x 2 sides
    bytes_accessed = int(
        dis_emb.size * 4 + drug_emb.size * 4
        + dis_drug_matrix.size * dis_drug_matrix.dtype.itemsize
        + drug_dis_matrix.size * drug_dis_matrix.dtype.itemsize
        + d_i.size * 4 + d_j.size * 4
        + (dis_num + drug_num) * 4 * F * 4)

    kernel = functools.partial(_bpr_fused_kernel, mxu_dtype=mxu_dtype)
    vmem_spec = pl.BlockSpec(memory_space=pltpu.MemorySpace.VMEM)

    return pl.pallas_call(
        kernel,
        out_shape=out_shapes,
        in_specs=[vmem_spec] * 6,
        out_specs=(vmem_spec, vmem_spec),
        compiler_params=pltpu.CompilerParams(vmem_limit_bytes=vmem_limit),
        cost_estimate=pl.CostEstimate(
            flops=flops, transcendentals=0, bytes_accessed=bytes_accessed),
    )(dis_emb, drug_emb, dis_drug_matrix, drug_dis_matrix, d_i, d_j)


# Pure-JAX reference (mirrors the torch forward exactly) for verification.
def bpr_forward_ref(dis_emb, drug_emb, dis_drug_matrix, drug_dis_matrix, d_i, d_j):
    relu = lambda x: jnp.maximum(x, 0.0)
    g1_dis = relu(dis_drug_matrix @ drug_emb + dis_emb * d_i)
    g1_drug = relu(drug_dis_matrix @ dis_emb + drug_emb * d_j)
    g2_dis = relu(dis_drug_matrix @ g1_drug + g1_dis * d_i)
    g2_drug = relu(drug_dis_matrix @ g1_dis + g1_drug * d_j)
    g3_dis = relu(dis_drug_matrix @ g2_drug + g2_dis * d_i)
    g3_drug = relu(drug_dis_matrix @ g2_dis + g2_drug * d_j)
    gcn_dis = relu(jnp.concatenate([dis_emb, g1_dis, g2_dis, g3_dis], -1))
    gcn_drug = relu(jnp.concatenate([drug_emb, g1_drug, g2_drug, g3_drug], -1))
    return gcn_dis, gcn_drug


if __name__ == "__main__":
    # Small, deterministic synthetic setup.
    dis_num, drug_num, factor_num = 16, 24, 32

    key = jax.random.PRNGKey(0)
    k1, k2, k3, k4, k5, k6 = jax.random.split(key, 6)

    # Embedding tables (init_features_u / init_features_i).
    init_features_u = jax.random.normal(k1, (dis_num, factor_num), jnp.float32)
    init_features_i = jax.random.normal(k2, (drug_num, factor_num), jnp.float32)

    # Normalized bipartite adjacency matrices (dense stand-ins for sparse mm).
    dis_drug_matrix = (jax.random.uniform(k3, (dis_num, drug_num)) < 0.3).astype(
        jnp.float32) * 0.1
    drug_dis_matrix = (jax.random.uniform(k4, (drug_num, dis_num)) < 0.3).astype(
        jnp.float32) * 0.1

    # d_i_train / d_j_train: per-node scalar, kept as (M, 1).
    d_i_train = jax.random.uniform(k5, (dis_num, 1), jnp.float32, 0.1, 1.0)
    d_j_train = jax.random.uniform(k6, (drug_num, 1), jnp.float32, 0.1, 1.0)

    args = (init_features_u, init_features_i, dis_drug_matrix, drug_dis_matrix,
            d_i_train, d_j_train)

    ref_dis, ref_drug = bpr_forward_ref(*args)

    # Default (bf16 MXU operands, f32 accumulate) — looser tolerance.
    fwd = jax.jit(bpr_forward)
    gcn_dis, gcn_drug = fwd(*args)
    jax.block_until_ready((gcn_dis, gcn_drug))
    assert gcn_dis.shape == (dis_num, 4 * factor_num)
    assert gcn_drug.shape == (drug_num, 4 * factor_num)
    assert jnp.allclose(gcn_dis, ref_dis, atol=5e-2, rtol=5e-2)
    assert jnp.allclose(gcn_drug, ref_drug, atol=5e-2, rtol=5e-2)

    # Exact-precision f32 path — tight tolerance.
    fwd_f32 = jax.jit(functools.partial(bpr_forward, use_bf16_matmul=False))
    gcn_dis32, gcn_drug32 = fwd_f32(*args)
    jax.block_until_ready((gcn_dis32, gcn_drug32))
    assert jnp.allclose(gcn_dis32, ref_dis, atol=1e-5, rtol=1e-5)
    assert jnp.allclose(gcn_drug32, ref_drug, atol=1e-5, rtol=1e-5)

    print("KERNEL_OK")
</pallas_src>

<mosaic_0001>
module attributes {stable_mosaic.version = 11 : i64} {
  func.func @_bpr_fused_kernel(%arg0: memref<16x32xf32, #tpu.memory_space<vmem>>, %arg1: memref<24x32xf32, #tpu.memory_space<vmem>>, %arg2: memref<16x24xbf16, #tpu.memory_space<vmem>>, %arg3: memref<24x16xbf16, #tpu.memory_space<vmem>>, %arg4: memref<16x1xf32, #tpu.memory_space<vmem>>, %arg5: memref<24x1xf32, #tpu.memory_space<vmem>>, %arg6: memref<16x128xf32, #tpu.memory_space<vmem>>, %arg7: memref<24x128xf32, #tpu.memory_space<vmem>>) attributes {dimension_semantics = [], scalar_prefetch = 0 : i64, scratch_operands = 0 : i64, tpu.core_type = #tpu.core_type<tc>} {
    %c0 = arith.constant 0 : index
    %c0_0 = arith.constant 0 : index
    %0 = vector.load %arg0[%c0, %c0_0] : memref<16x32xf32, #tpu.memory_space<vmem>>, vector<16x32xf32>
    %c0_1 = arith.constant 0 : index
    %c0_2 = arith.constant 0 : index
    %1 = vector.load %arg1[%c0_1, %c0_2] : memref<24x32xf32, #tpu.memory_space<vmem>>, vector<24x32xf32>
    %c0_3 = arith.constant 0 : index
    %c0_4 = arith.constant 0 : index
    %2 = vector.load %arg2[%c0_3, %c0_4] : memref<16x24xbf16, #tpu.memory_space<vmem>>, vector<16x24xbf16>
    %c0_5 = arith.constant 0 : index
    %c0_6 = arith.constant 0 : index
    %3 = vector.load %arg3[%c0_5, %c0_6] : memref<24x16xbf16, #tpu.memory_space<vmem>>, vector<24x16xbf16>
    %c0_7 = arith.constant 0 : index
    %c0_8 = arith.constant 0 : index
    %4 = vector.load %arg4[%c0_7, %c0_8] : memref<16x1xf32, #tpu.memory_space<vmem>>, vector<16x1xf32>
    %5 = vector.shape_cast %4 : vector<16x1xf32> to vector<16x1xf32>
    %6 = vector.broadcast %5 : vector<16x1xf32> to vector<16x32xf32>
    %c0_9 = arith.constant 0 : index
    %c0_10 = arith.constant 0 : index
    %7 = vector.load %arg5[%c0_9, %c0_10] : memref<24x1xf32, #tpu.memory_space<vmem>>, vector<24x1xf32>
    %8 = vector.shape_cast %7 : vector<24x1xf32> to vector<24x1xf32>
    %9 = vector.broadcast %8 : vector<24x1xf32> to vector<24x32xf32>
    %cst = arith.constant 0.000000e+00 : f32
    %10 = vector.broadcast %cst : f32 to vector<16x32xf32>
    %11 = arith.maximumf %0, %10 : vector<16x32xf32>
    %cst_11 = arith.constant 0.000000e+00 : f32
    %12 = vector.broadcast %cst_11 : f32 to vector<24x32xf32>
    %13 = arith.maximumf %1, %12 : vector<24x32xf32>
    %14 = arith.truncf %1 : vector<24x32xf32> to vector<24x32xbf16>
    %cst_12 = arith.constant dense<0.000000e+00> : vector<16x32xf32>
    %15 = tpu.matmul %2, %14, %cst_12 {dimension_numbers = #tpu.dot_dimension_numbers<[1], [0], [0], [1], [0, 0, 1, 1], [], []>} : vector<16x24xbf16>, vector<24x32xbf16>, vector<16x32xf32> -> vector<16x32xf32>
    %16 = arith.mulf %0, %6 : vector<16x32xf32>
    %17 = arith.addf %15, %16 : vector<16x32xf32>
    %cst_13 = arith.constant 0.000000e+00 : f32
    %18 = vector.broadcast %cst_13 : f32 to vector<16x32xf32>
    %19 = arith.maximumf %17, %18 : vector<16x32xf32>
    %20 = arith.truncf %0 : vector<16x32xf32> to vector<16x32xbf16>
    %cst_14 = arith.constant dense<0.000000e+00> : vector<24x32xf32>
    %21 = tpu.matmul %3, %20, %cst_14 {dimension_numbers = #tpu.dot_dimension_numbers<[1], [0], [0], [1], [0, 0, 1, 1], [], []>} : vector<24x16xbf16>, vector<16x32xbf16>, vector<24x32xf32> -> vector<24x32xf32>
    %22 = arith.mulf %1, %9 : vector<24x32xf32>
    %23 = arith.addf %21, %22 : vector<24x32xf32>
    %cst_15 = arith.constant 0.000000e+00 : f32
    %24 = vector.broadcast %cst_15 : f32 to vector<24x32xf32>
    %25 = arith.maximumf %23, %24 : vector<24x32xf32>
    %26 = arith.truncf %25 : vector<24x32xf32> to vector<24x32xbf16>
    %cst_16 = arith.constant dense<0.000000e+00> : vector<16x32xf32>
    %27 = tpu.matmul %2, %26, %cst_16 {dimension_numbers = #tpu.dot_dimension_numbers<[1], [0], [0], [1], [0, 0, 1, 1], [], []>} : vector<16x24xbf16>, vector<24x32xbf16>, vector<16x32xf32> -> vector<16x32xf32>
    %28 = arith.mulf %19, %6 : vector<16x32xf32>
    %29 = arith.addf %27, %28 : vector<16x32xf32>
    %cst_17 = arith.constant 0.000000e+00 : f32
    %30 = vector.broadcast %cst_17 : f32 to vector<16x32xf32>
    %31 = arith.maximumf %29, %30 : vector<16x32xf32>
    %32 = arith.truncf %19 : vector<16x32xf32> to vector<16x32xbf16>
    %cst_18 = arith.constant dense<0.000000e+00> : vector<24x32xf32>
    %33 = tpu.matmul %3, %32, %cst_18 {dimension_numbers = #tpu.dot_dimension_numbers<[1], [0], [0], [1], [0, 0, 1, 1], [], []>} : vector<24x16xbf16>, vector<16x32xbf16>, vector<24x32xf32> -> vector<24x32xf32>
    %34 = arith.mulf %25, %9 : vector<24x32xf32>
    %35 = arith.addf %33, %34 : vector<24x32xf32>
    %cst_19 = arith.constant 0.000000e+00 : f32
    %36 = vector.broadcast %cst_19 : f32 to vector<24x32xf32>
    %37 = arith.maximumf %35, %36 : vector<24x32xf32>
    %38 = arith.truncf %37 : vector<24x32xf32> to vector<24x32xbf16>
    %cst_20 = arith.constant dense<0.000000e+00> : vector<16x32xf32>
    %39 = tpu.matmul %2, %38, %cst_20 {dimension_numbers = #tpu.dot_dimension_numbers<[1], [0], [0], [1], [0, 0, 1, 1], [], []>} : vector<16x24xbf16>, vector<24x32xbf16>, vector<16x32xf32> -> vector<16x32xf32>
    %40 = arith.mulf %31, %6 : vector<16x32xf32>
    %41 = arith.addf %39, %40 : vector<16x32xf32>
    %cst_21 = arith.constant 0.000000e+00 : f32
    %42 = vector.broadcast %cst_21 : f32 to vector<16x32xf32>
    %43 = arith.maximumf %41, %42 : vector<16x32xf32>
    %44 = arith.truncf %31 : vector<16x32xf32> to vector<16x32xbf16>
    %cst_22 = arith.constant dense<0.000000e+00> : vector<24x32xf32>
    %45 = tpu.matmul %3, %44, %cst_22 {dimension_numbers = #tpu.dot_dimension_numbers<[1], [0], [0], [1], [0, 0, 1, 1], [], []>} : vector<24x16xbf16>, vector<16x32xbf16>, vector<24x32xf32> -> vector<24x32xf32>
    %46 = arith.mulf %37, %9 : vector<24x32xf32>
    %47 = arith.addf %45, %46 : vector<24x32xf32>
    %cst_23 = arith.constant 0.000000e+00 : f32
    %48 = vector.broadcast %cst_23 : f32 to vector<24x32xf32>
    %49 = arith.maximumf %47, %48 : vector<24x32xf32>
    %50 = tpu.concatenate %11, %19, %31, %43 in 1 : vector<16x32xf32>, vector<16x32xf32>, vector<16x32xf32>, vector<16x32xf32> -> vector<16x128xf32>
    %c0_24 = arith.constant 0 : index
    %c0_25 = arith.constant 0 : index
    %51 = vector.load %arg6[%c0_24, %c0_25] : memref<16x128xf32, #tpu.memory_space<vmem>>, vector<16x128xf32>
    tpu.vector_store %arg6[%c0_24, %c0_25], %50 {strides = array<i32>} : memref<16x128xf32, #tpu.memory_space<vmem>>, vector<16x128xf32>,
    %52 = tpu.concatenate %13, %25, %37, %49 in 1 : vector<24x32xf32>, vector<24x32xf32>, vector<24x32xf32>, vector<24x32xf32> -> vector<24x128xf32>
    %c0_26 = arith.constant 0 : index
    %c0_27 = arith.constant 0 : index
    %53 = vector.load %arg7[%c0_26, %c0_27] : memref<24x128xf32, #tpu.memory_space<vmem>>, vector<24x128xf32>
    tpu.vector_store %arg7[%c0_26, %c0_27], %52 {strides = array<i32>} : memref<24x128xf32, #tpu.memory_space<vmem>>, vector<24x128xf32>,
    return
  }
}

</mosaic_0001>

<llo_original>
// kernel: bpr_forward.1
$region0: #{bpr_forward.1}
  #allocation0 [shape = 'u32[]', space=smem, size = 0x4, offset = 0x4, fixed_abs, tag = 'smem constant byte address 0x4 - core index']
  #allocation1 [shape = 'u32[72,128]{1,0:T(1,128)}', space=vmem, size = 0x9000, scoped, tag = 'internal scratch']
  %s0 = inlined_call_operand.vmem [shape: f32[16,32], index: 0, kind: input, shape index: {}]
  %s1 = inlined_call_operand.vmem [shape: f32[24,32], index: 1, kind: input, shape index: {}]
  %s2 = inlined_call_operand.vmem [shape: bf16[16,24], index: 2, kind: input, shape index: {}]
  %s3 = inlined_call_operand.vmem [shape: bf16[24,16], index: 3, kind: input, shape index: {}]
  %s4 = inlined_call_operand.vmem [shape: f32[16,1], index: 4, kind: input, shape index: {}]
  %s5 = inlined_call_operand.vmem [shape: f32[24,1], index: 5, kind: input, shape index: {}]
  %s6 = inlined_call_operand.hbm [shape: f32[16,128], index: 6, kind: output, shape index: {0}]
  %s7 = inlined_call_operand.hbm [shape: f32[24,128], index: 7, kind: output, shape index: {1}]
  %8 = xla_tuple %s6, %s7
  %s9 = sld [smem:[#allocation0]]
  $region42: #{bpr_forward.1} parent=0
    _
  %s11 = ssub.s32 1, %s9
  %s12 = scalar_select 0, %s11, %s9
  $region1: #{bpr_forward.1} parent=0
    #allocation2 [shape = 'u8[8192]{0}', space=vmem, size = 0x2000, scoped, tag = 'output window, operand 0, single buffered']
    #allocation3 [shape = 's32[1]{0}', space=sflag, size = 0x4, scoped, tag = 'scoped memory for bpr_forward.1']
    #allocation4 [shape = 'u8[12288]{0}', space=vmem, size = 0x3000, scoped, tag = 'output window, operand 1, single buffered']
    #allocation5 [shape = 's32[1]{0}', space=sflag, size = 0x4, scoped, tag = 'scoped memory for bpr_forward.1']
    %13 = vsyncpa [#allocation3], 0
    %14 = vsyncpa [#allocation5], 0
    // Predicated region
    $region2: #{bpr_forward.1} parent=1 // pred_check
      _
    $region3: #{bpr_forward.1} parent=1 // pred_check_branch
      %16 = sbr.rel (0) target = $region5
    $region4: #{bpr_forward.1} parent=1 // pred_region
      _
    $region5: #{bpr_forward.1} parent=1 // pred_fallthru
      _
    // Predicated region
    $region6: #{bpr_forward.1} parent=1 // pred_check
      _
    $region7: #{bpr_forward.1} parent=1 // pred_check_branch
      %18 = sbr.rel (0) target = $region9
    $region8: #{bpr_forward.1} parent=1 // pred_region
      _
    $region9: #{bpr_forward.1} parent=1 // pred_fallthru
      _
    // Predicated region
    $region10: #{bpr_forward.1} parent=1 // pred_check
      _
    $region11: #{bpr_forward.1} parent=1 // pred_check_branch
      %20 = sbr.rel (0) target = $region13
    $region12: #{bpr_forward.1} parent=1 // pred_region
      _
    $region13: #{bpr_forward.1} parent=1 // pred_fallthru
      _
    // Predicated region
    $region14: #{bpr_forward.1} parent=1 // pred_check
      _
    $region15: #{bpr_forward.1} parent=1 // pred_check_branch
      %22 = sbr.rel (0) target = $region17
    $region16: #{bpr_forward.1} parent=1 // pred_region
      _
    $region17: #{bpr_forward.1} parent=1 // pred_fallthru
      _
    // Predicated region
    $region18: #{bpr_forward.1} parent=1 // pred_check
      _
    $region19: #{bpr_forward.1} parent=1 // pred_check_branch
      %24 = sbr.rel (0) target = $region21
    $region20: #{bpr_forward.1} parent=1 // pred_region
      _
    $region21: #{bpr_forward.1} parent=1 // pred_fallthru
      _
    // Predicated region
    $region22: #{bpr_forward.1} parent=1 // pred_check
      _
    $region23: #{bpr_forward.1} parent=1 // pred_check_branch
      %26 = sbr.rel (0) target = $region25
    $region24: #{bpr_forward.1} parent=1 // pred_region
      _
    $region25: #{bpr_forward.1} parent=1 // pred_fallthru
      _
    %v28 = vld [vmem:[%s0] sm:$0xff]
    %v29 = vld [vmem:[%s0 + $0x8] sm:$0xff]
    %v30 = vld [vmem:[%s1] sm:$0xff]
    %v31 = vld [vmem:[%s1 + $0x8] sm:$0xff]
    %v32 = vld [vmem:[%s1 + $0x10] sm:$0xff]
    %v33 = vld [vmem:[%s2] sm:$0xf]
    %v34 = vld [vmem:[%s2 + $0x4] sm:$0xf]
    %v35 = vld [vmem:[%s3] sm:$0xf]
    %v36 = vld [vmem:[%s3 + $0x4] sm:$0xf]
    %v37 = vld [vmem:[%s3 + $0x8] sm:$0xf]
    %v38 = vld [vmem:[%s4] sm:$0xff]
    %v39 = vld [vmem:[%s4 + $0x8] sm:$0xff]
    %41 = vset.pattern.permute.xlu0 0
    %42 = vperm.xlu0 %41, %v38
    %v43 = vpop.permute.xlu0 %42
    %46 = vset.pattern.permute.xlu0 0
    %47 = vperm.xlu0 %46, %v39
    %v48 = vpop.permute.xlu0 %47
    %v50 = vld [vmem:[%s5] sm:$0xff]
    %v51 = vld [vmem:[%s5 + $0x8] sm:$0xff]
    %v52 = vld [vmem:[%s5 + $0x10] sm:$0xff]
    %54 = vset.pattern.permute.xlu0 0
    %55 = vperm.xlu0 %54, %v50
    %v56 = vpop.permute.xlu0 %55
    %59 = vset.pattern.permute.xlu0 0
    %60 = vperm.xlu0 %59, %v51
    %v61 = vpop.permute.xlu0 %60
    %64 = vset.pattern.permute.xlu0 0
    %65 = vperm.xlu0 %64, %v52
    %v66 = vpop.permute.xlu0 %65
    %v68 = vmax.f32 %v28, 0.0
    %v69 = vmax.f32 %v29, 0.0
    %v70 = vmax.f32 %v30, 0.0
    %v71 = vmax.f32 %v31, 0.0
    %v72 = vmax.f32 %v32, 0.0
    %v73 = vpack.c.bf16 %v31, %v30
    %v74 = vpack.c.bf16 %v32, %v32
    %v75 = vmul.f32 %v28, %v43
    %v76 = vmul.f32 %v29, %v48
    %v79 = vunpack.c.l.b16 %v33
    %v80 = vunpack.c.l.b16 %v34
    %v81 = vpack.c.b16 %v80, %v79
    %vm82 = vcmask 195584
    %v84 = vsel %vm82, %v81, 0
    %vm86 = vcmask 1043456
    %v88 = vsel %vm86, %v74, 0
    %90 = vmatpush.bf16.msra.mxu0 0
    %91 = vmatpush.bf16.msra.mxu0 0
    %92 = vmatpush.bf16.msra.mxu0 0
    %93 = vmatpush.bf16.msra.mxu0 0
    %94 = vmatpush.bf16.msra.mxu0 0
    %95 = vmatpush.bf16.msra.mxu0 0
    %96 = vmatpush.bf16.msra.mxu0 %v88
    %97 = vmatpush.bf16.msra.mxu0 %v73
    %98 = vmatmul.bf16.gmra.mxu0 %v84
    %v99 = vpop.f32.mrf.mxu0
    %v100 = vadd.f32 %v75, %v99
    %v101 = vpop.f32.mrf.mxu0
    %v102 = vadd.f32 %v76, %v101
    %103 = vdwg.mxu0
    %v104 = vmax.f32 %v100, 0.0
    %v105 = vmax.f32 %v102, 0.0
    %v106 = vpack.c.bf16 %v29, %v28
    %v107 = vmul.f32 %v30, %v56
    %v108 = vmul.f32 %v31, %v61
    %v109 = vmul.f32 %v32, %v66
    %v113 = vunpack.c.l.b16 %v35
    %v114 = vunpack.c.l.b16 %v36
    %v115 = vunpack.c.l.b16 %v37
    %v116 = vpack.c.b16 %v114, %v113
    %v117 = vpack.c.b16 %v115, %v115
    %vm118 = vcmask 130048
    %v120 = vsel %vm118, %v116, 0
    %v123 = vsel %vm118, %v117, 0
    %125 = vmatpush.bf16.msra.mxu0 0
    %126 = vmatpush.bf16.msra.mxu0 0
    %127 = vmatpush.bf16.msra.mxu0 0
    %128 = vmatpush.bf16.msra.mxu0 0
    %129 = vmatpush.bf16.msra.mxu0 0
    %130 = vmatpush.bf16.msra.mxu0 0
    %131 = vmatpush.bf16.msra.mxu0 0
    %132 = vmatpush.bf16.msra.mxu0 %v106
    %133 = vmatmul.bf16.gmra.mxu0 %v120
    %v134 = vpop.f32.mrf.mxu0
    %v135 = vadd.f32 %v107, %v134
    %v136 = vpop.f32.mrf.mxu0
    %v137 = vadd.f32 %v108, %v136
    %138 = vmatmul.bf16.gmra.mxu0 %v123
    %v139 = vpop.f32.mrf.mxu0
    %v140 = vadd.f32 %v109, %v139
    %v141 = vpop.f32.mrf.mxu0
    %142 = vdwg.mxu0
    %v143 = vmax.f32 %v135, 0.0
    %v144 = vmax.f32 %v137, 0.0
    %v145 = vmax.f32 %v140, 0.0
    %v146 = vpack.c.bf16 %v144, %v143
    %v147 = vpack.c.bf16 %v145, %v145
    %v148 = vmul.f32 %v104, %v43
    %v149 = vmul.f32 %v105, %v48
    %v151 = vsel %vm86, %v147, 0
    %153 = vmatpush.bf16.msra.mxu0 0
    %154 = vmatpush.bf16.msra.mxu0 0
    %155 = vmatpush.bf16.msra.mxu0 0
    %156 = vmatpush.bf16.msra.mxu0 0
    %157 = vmatpush.bf16.msra.mxu0 0
    %158 = vmatpush.bf16.msra.mxu0 0
    %159 = vmatpush.bf16.msra.mxu0 %v151
    %160 = vmatpush.bf16.msra.mxu0 %v146
    %161 = vmatmul.bf16.gmra.mxu0 %v84
    %v162 = vpop.f32.mrf.mxu0
    %v163 = vadd.f32 %v148, %v162
    %v164 = vpop.f32.mrf.mxu0
    %v165 = vadd.f32 %v149, %v164
    %166 = vdwg.mxu0
    %v167 = vmax.f32 %v163, 0.0
    %v168 = vmax.f32 %v165, 0.0
    %v169 = vpack.c.bf16 %v105, %v104
    %v170 = vmul.f32 %v143, %v56
    %v171 = vmul.f32 %v144, %v61
    %v172 = vmul.f32 %v145, %v66
    %173 = vmatpush.bf16.msra.mxu0 0
    %174 = vmatpush.bf16.msra.mxu0 0
    %175 = vmatpush.bf16.msra.mxu0 0
    %176 = vmatpush.bf16.msra.mxu0 0
    %177 = vmatpush.bf16.msra.mxu0 0
    %178 = vmatpush.bf16.msra.mxu0 0
    %179 = vmatpush.bf16.msra.mxu0 0
    %180 = vmatpush.bf16.msra.mxu0 %v169
    %181 = vmatmul.bf16.gmra.mxu0 %v120
    %v182 = vpop.f32.mrf.mxu0
    %v183 = vadd.f32 %v170, %v182
    %v184 = vpop.f32.mrf.mxu0
    %v185 = vadd.f32 %v171, %v184
    %186 = vmatmul.bf16.gmra.mxu0 %v123
    %v187 = vpop.f32.mrf.mxu0
    %v188 = vadd.f32 %v172, %v187
    %v189 = vpop.f32.mrf.mxu0
    %190 = vdwg.mxu0
    %v191 = vmax.f32 %v183, 0.0
    %v192 = vmax.f32 %v185, 0.0
    %v193 = vmax.f32 %v188, 0.0
    %v194 = vpack.c.bf16 %v192, %v191
    %v195 = vpack.c.bf16 %v193, %v193
    %v196 = vmul.f32 %v167, %v43
    %v197 = vmul.f32 %v168, %v48
    %v199 = vsel %vm86, %v195, 0
    %201 = vmatpush.bf16.msra.mxu0 0
    %202 = vmatpush.bf16.msra.mxu0 0
    %203 = vmatpush.bf16.msra.mxu0 0
    %204 = vmatpush.bf16.msra.mxu0 0
    %205 = vmatpush.bf16.msra.mxu0 0
    %206 = vmatpush.bf16.msra.mxu0 0
    %207 = vmatpush.bf16.msra.mxu0 %v199
    %208 = vmatpush.bf16.msra.mxu0 %v194
    %209 = vmatmul.bf16.gmra.mxu0 %v84
    %v210 = vpop.f32.mrf.mxu0
    %v211 = vadd.f32 %v196, %v210
    %v212 = vpop.f32.mrf.mxu0
    %v213 = vadd.f32 %v197, %v212
    %214 = vdwg.mxu0
    %v215 = vmax.f32 %v211, 0.0
    %v216 = vmax.f32 %v213, 0.0
    %v217 = vpack.c.bf16 %v168, %v167
    %v218 = vmul.f32 %v191, %v56
    %v219 = vmul.f32 %v192, %v61
    %v220 = vmul.f32 %v193, %v66
    %221 = vmatpush.bf16.msra.mxu0 0
    %222 = vmatpush.bf16.msra.mxu0 0
    %223 = vmatpush.bf16.msra.mxu0 0
    %224 = vmatpush.bf16.msra.mxu0 0
    %225 = vmatpush.bf16.msra.mxu0 0
    %226 = vmatpush.bf16.msra.mxu0 0
    %227 = vmatpush.bf16.msra.mxu0 0
    %228 = vmatpush.bf16.msra.mxu0 %v217
    %229 = vmatmul.bf16.gmra.mxu0 %v120
    %v230 = vpop.f32.mrf.mxu0
    %v231 = vadd.f32 %v218, %v230
    %v232 = vpop.f32.mrf.mxu0
    %v233 = vadd.f32 %v219, %v232
    %234 = vmatmul.bf16.gmra.mxu0 %v123
    %v235 = vpop.f32.mrf.mxu0
    %v236 = vadd.f32 %v220, %v235
    %v237 = vpop.f32.mrf.mxu0
    %238 = vdwg.mxu0
    %v239 = vmax.f32 %v231, 0.0
    %v240 = vmax.f32 %v233, 0.0
    %v241 = vmax.f32 %v236, 0.0
    %244 = vrot.lane.b32.xlu0 %v104, 32
    %v245 = vpop.permute.xlu0 %244
    %246 = vrot.lane.b32.xlu0 %v105, 32
    %v247 = vpop.permute.xlu0 %246
    %252 = vrot.lane.b32.xlu0 %v167, 64
    %v253 = vpop.permute.xlu0 %252
    %254 = vrot.lane.b32.xlu0 %v168, 64
    %v255 = vpop.permute.xlu0 %254
    %260 = vrot.lane.b32.xlu0 %v215, 96
    %v261 = vpop.permute.xlu0 %260
    %262 = vrot.lane.b32.xlu0 %v216, 96
    %v263 = vpop.permute.xlu0 %262
    %vm266 = vcmask 261120
    %v267 = vsel %vm266, %v68, %v245
    %v268 = vsel %vm266, %v69, %v247
    %vm269 = vcmask 523264
    %v270 = vsel %vm269, %v267, %v253
    %v271 = vsel %vm269, %v268, %v255
    %vm272 = vcmask 785408
    %v273 = vsel %vm272, %v270, %v261
    %v274 = vsel %vm272, %v271, %v263
    %275 = vst [vmem:[#allocation2] sm:$0xff] %v273
    %276 = vst [vmem:[#allocation2 + $0x8] sm:$0xff] %v274
    %280 = vrot.lane.b32.xlu0 %v143, 32
    %v281 = vpop.permute.xlu0 %280
    %282 = vrot.lane.b32.xlu0 %v144, 32
    %v283 = vpop.permute.xlu0 %282
    %284 = vrot.lane.b32.xlu0 %v145, 32
    %v285 = vpop.permute.xlu0 %284
    %292 = vrot.lane.b32.xlu0 %v191, 64
    %v293 = vpop.permute.xlu0 %292
    %294 = vrot.lane.b32.xlu0 %v192, 64
    %v295 = vpop.permute.xlu0 %294
    %296 = vrot.lane.b32.xlu0 %v193, 64
    %v297 = vpop.permute.xlu0 %296
    %304 = vrot.lane.b32.xlu0 %v239, 96
    %v305 = vpop.permute.xlu0 %304
    %306 = vrot.lane.b32.xlu0 %v240, 96
    %v307 = vpop.permute.xlu0 %306
    %308 = vrot.lane.b32.xlu0 %v241, 96
    %v309 = vpop.permute.xlu0 %308
    %v313 = vsel %vm266, %v70, %v281
    %v314 = vsel %vm266, %v71, %v283
    %v315 = vsel %vm266, %v72, %v285
    %v316 = vsel %vm269, %v313, %v293
    %v317 = vsel %vm269, %v314, %v295
    %v318 = vsel %vm269, %v315, %v297
    %v319 = vsel %vm272, %v316, %v305
    %v320 = vsel %vm272, %v317, %v307
    %v321 = vsel %vm272, %v318, %v309
    %322 = vst [vmem:[#allocation4] sm:$0xff] %v319
    %323 = vst [vmem:[#allocation4 + $0x8] sm:$0xff] %v320
    %324 = vst [vmem:[#allocation4 + $0x10] sm:$0xff] %v321
    // Predicated region
    $region26: #{bpr_forward.1} parent=1 // pred_check
      _
    $region27: #{bpr_forward.1} parent=1 // pred_check_branch
      %326 = sbr.rel (0) target = $region29
    $region28: #{bpr_forward.1} parent=1 // pred_region
      %328 = vsyncadd [#allocation3], 0
      %s329 = sshll.u32 [#allocation2], 4
      %s330 = int_to_ptr.vmem [resolvable:$true] %s329
      %s331 = sshll.u32 %s6, 4
      %s332 = int_to_ptr.hbm [resolvable:$true] %s331
      %337 = dma.vmem_to_hbm [thread:$0]  %s330, 256, %s332, [#allocation3], 128, 128, 8
    $region29: #{bpr_forward.1} parent=1 // pred_fallthru
      _
    // Predicated region
    $region30: #{bpr_forward.1} parent=1 // pred_check
      _
    $region31: #{bpr_forward.1} parent=1 // pred_check_branch
      %339 = sbr.rel (0) target = $region33
    $region32: #{bpr_forward.1} parent=1 // pred_region
      %341 = vsyncadd [#allocation5], 0
      %s342 = sshll.u32 [#allocation4], 4
      %s343 = int_to_ptr.vmem [resolvable:$true] %s342
      %s344 = sshll.u32 %s7, 4
      %s345 = int_to_ptr.hbm [resolvable:$true] %s344
      %350 = dma.vmem_to_hbm [thread:$0]  %s343, 384, %s345, [#allocation5], 128, 128, 8
    $region33: #{bpr_forward.1} parent=1 // pred_fallthru
      _
    // Predicated region
    $region34: #{bpr_forward.1} parent=1 // pred_check
      _
    $region35: #{bpr_forward.1} parent=1 // pred_check_branch
      %352 = sbr.rel (0) target = $region37
    $region36: #{bpr_forward.1} parent=1 // pred_region
      %354 = dma.done [#allocation3], 256
    $region37: #{bpr_forward.1} parent=1 // pred_fallthru
      _
    // Predicated region
    $region38: #{bpr_forward.1} parent=1 // pred_check
      _
    $region39: #{bpr_forward.1} parent=1 // pred_check_branch
      %356 = sbr.rel (0) target = $region41
    $region40: #{bpr_forward.1} parent=1 // pred_region
      %358 = dma.done [#allocation5], 384
    $region41: #{bpr_forward.1} parent=1 // pred_fallthru
      _
    %359 = vsyncpa [#allocation3], 1
    %360 = vsyncpa [#allocation5], 1

</llo_original>
